<compile_context>
chip_gen: v7x
topology: tpu7x:2x2x1
jax: 0.10.0
libtpu: 0.0.40
codegen_flags: <defaults>
</compile_context>

<pallas_src>
import jax
import jax.numpy as jnp
from jax.experimental import pallas as pl
from jax.experimental.pallas import tpu as pltpu

_NEG_BIG = -1e30  # finite "minus infinity" for padded logit columns (f32 only)


def _round_up(n, m):
    return ((n + m - 1) // m) * m


def entropy_model_kernel(x_ref, w_ref, b_ref, o_ref):
    # x: (TB, Cp) bf16, w: (Cp, Cp) bf16 (pre-transposed, VMEM-resident),
    # b: (1, Cp) f32.  MXU consumes bf16 directly, accumulates in f32.
    logits = jnp.dot(x_ref[...], w_ref[...],
                     preferred_element_type=jnp.float32) + b_ref[...]

    # Softmax over the feature axis.  Padded columns carry a -1e30 bias and
    # zero weight, so exp() underflows to exactly 0 and they do not perturb
    # the denominator.  Exact division keeps each row summing to 1 to f32
    # rounding (approx reciprocal was not accurate enough).
    m = jnp.max(logits, axis=-1, keepdims=True)
    e = jnp.exp(logits - m)
    denom = jnp.sum(e, axis=-1, keepdims=True)
    o_ref[...] = (e / denom).astype(o_ref.dtype)


def entropy_model_forward(x, w_t, b_p, c_real, *, block_b=512,
                          matmul_dtype=jnp.bfloat16):
    """x: (B, C).  w_t: (Cp, Cp) padded, transposed, matmul-dtype weight.
    b_p: (1, Cp) f32 padded bias.  c_real: original feature count C."""
    B, C = x.shape
    Cp = w_t.shape[0]
    assert C == c_real

    # Batch tile: 8-row aligned, and split so the grid has >= 2 steps when B
    # allows it (keeps both v7x TensorCores busy; free on v5e/v6e).
    TB = min(block_b, max(_round_up(pl.cdiv(B, 2), 8), 8))
    Bp = _round_up(B, TB)

    x_mm = x.astype(matmul_dtype)
    need_pad = (Bp != B) or (Cp != C)
    if need_pad:
        x_p = jnp.zeros((Bp, Cp), matmul_dtype).at[:B, :C].set(x_mm)
    else:
        x_p = x_mm

    in_itemsize = jnp.dtype(matmul_dtype).itemsize
    out_dtype = x.dtype
    out_itemsize = jnp.dtype(out_dtype).itemsize

    # VMEM footprint: double-buffered x/out tiles + single-buffered weight/bias.
    footprint = (2 * TB * Cp * in_itemsize      # x tiles
                 + 2 * TB * Cp * out_itemsize   # out tiles
                 + 1 * Cp * Cp * in_itemsize    # resident weight (Buffered(1))
                 + 1 * Cp * 4)                  # resident bias (f32)
    vmem_limit = int(min(max(footprint + (2 << 20), 16 << 20), 48 << 20))

    bytes_accessed = (x_p.size * in_itemsize
                      + w_t.size * in_itemsize
                      + b_p.size * 4
                      + Bp * Cp * out_itemsize)

    out_p = pl.pallas_call(
        entropy_model_kernel,
        out_shape=jax.ShapeDtypeStruct((Bp, Cp), out_dtype),
        grid=(Bp // TB,),
        in_specs=[
            # Streaming x tile (double-buffered by default).
            pl.BlockSpec((TB, Cp), lambda i: (i, 0)),
            # Weight / bias: constant index_map -> fetched once, kept resident;
            # single-buffer them to halve the dominant VMEM allocation.
            pl.BlockSpec((Cp, Cp), lambda i: (0, 0),
                         pipeline_mode=pl.Buffered(1)),
            pl.BlockSpec((1, Cp), lambda i: (0, 0),
                         pipeline_mode=pl.Buffered(1)),
        ],
        out_specs=pl.BlockSpec((TB, Cp), lambda i: (i, 0)),
        compiler_params=pltpu.CompilerParams(
            dimension_semantics=("parallel",),   # batch rows independent
            vmem_limit_bytes=vmem_limit,
        ),
        cost_estimate=pl.CostEstimate(
            flops=2 * Bp * Cp * Cp,
            transcendentals=Bp * Cp,
            bytes_accessed=bytes_accessed,
        ),
    )(x_p, w_t, b_p)

    return out_p[:B, :C] if need_pad else out_p


class EntropyModel:
    """JAX/Pallas equivalent of the PyTorch EntropyModel (Linear + Softmax)."""

    def __init__(self, weight, bias, *, block_b=512, matmul_dtype=jnp.bfloat16):
        # weight: (C_out, C_in) as in nn.Linear; here C_out == C_in == C.
        C = weight.shape[1]
        Cp = max(_round_up(C, 128), 128)
        # Pad + transpose + cast ONCE (parameters, not activations).
        w_t = (jnp.zeros((Cp, Cp), matmul_dtype)
               .at[:C, :C].set(weight.T.astype(matmul_dtype)))
        # Bias stays f32 so the -1e30 sentinel is representable and the
        # logits/softmax epilogue stays in f32.
        b_p = (jnp.full((1, Cp), _NEG_BIG, dtype=jnp.float32)
               .at[0, :C].set(bias.astype(jnp.float32)))
        self.C = C
        self.w_t = w_t
        self.b_p = b_p
        self.block_b = block_b
        self.matmul_dtype = matmul_dtype

    def __call__(self, x):
        return entropy_model_forward(x, self.w_t, self.b_p, self.C,
                                     block_b=self.block_b,
                                     matmul_dtype=self.matmul_dtype)


if __name__ == "__main__":
    key = jax.random.PRNGKey(0)
    k_x, k_w, k_b, k_x2 = jax.random.split(key, 4)

    batch = 8
    compressed_size = 32

    # Deterministic "parameter init" mimicking nn.Linear shapes.
    x = jax.random.normal(k_x, (batch, compressed_size), dtype=jnp.float32)
    weight = jax.random.normal(k_w, (compressed_size, compressed_size),
                               dtype=jnp.float32) * 0.1
    bias = jax.random.normal(k_b, (compressed_size,), dtype=jnp.float32) * 0.1

    model = EntropyModel(weight, bias)

    out = jax.block_until_ready(model(x))
    ref = jax.nn.softmax(x @ weight.T + bias, axis=1)
    assert out.shape == (batch, compressed_size)
    assert jnp.allclose(out, ref, atol=2e-3, rtol=2e-3)
    assert jnp.allclose(jnp.sum(out, axis=1), 1.0, atol=1e-3)

    # Larger batch exercises the multi-step batch pipeline (grid >= 2).
    big_batch = 512
    x_big = jax.random.normal(k_x2, (big_batch, compressed_size),
                              dtype=jnp.float32)
    out_big = jax.block_until_ready(model(x_big))
    ref_big = jax.nn.softmax(x_big @ weight.T + bias, axis=1)
    assert out_big.shape == (big_batch, compressed_size)
    assert jnp.allclose(out_big, ref_big, atol=2e-3, rtol=2e-3)
    assert jnp.allclose(jnp.sum(out_big, axis=1), 1.0, atol=1e-3)

    print("KERNEL_OK")
</pallas_src>

<mosaic_0001>
module attributes {stable_mosaic.version = 11 : i64} {
  func.func @entropy_model_kernel(%arg0: i32, %arg1: memref<8x128xbf16, #tpu.memory_space<vmem>>, %arg2: memref<128x128xbf16, #tpu.memory_space<vmem>>, %arg3: memref<1x128xf32, #tpu.memory_space<vmem>>, %arg4: memref<8x128xf32, #tpu.memory_space<vmem>>) attributes {dimension_semantics = [#tpu.dimension_semantics<parallel>], iteration_bounds = array<i64: 1>, scalar_prefetch = 0 : i64, scratch_operands = 0 : i64, tpu.core_type = #tpu.core_type<tc>, window_params = [{transform_indices = @transform_0, window_bounds = array<i64: 8, 128>}, {pipeline_mode = #tpu.pipeline_mode<synchronous>, transform_indices = @transform_1, window_bounds = array<i64: 128, 128>}, {pipeline_mode = #tpu.pipeline_mode<synchronous>, transform_indices = @transform_2, window_bounds = array<i64: 1, 128>}, {transform_indices = @transform_3, window_bounds = array<i64: 8, 128>}]} {
    %c0 = arith.constant 0 : index
    %c0_0 = arith.constant 0 : index
    %0 = vector.load %arg1[%c0, %c0_0] : memref<8x128xbf16, #tpu.memory_space<vmem>>, vector<8x128xbf16>
    %c0_1 = arith.constant 0 : index
    %c0_2 = arith.constant 0 : index
    %1 = vector.load %arg2[%c0_1, %c0_2] : memref<128x128xbf16, #tpu.memory_space<vmem>>, vector<128x128xbf16>
    %cst = arith.constant dense<0.000000e+00> : vector<8x128xf32>
    %2 = tpu.matmul %0, %1, %cst {dimension_numbers = #tpu.dot_dimension_numbers<[1], [0], [0], [1], [0, 0, 1, 1], [], []>} : vector<8x128xbf16>, vector<128x128xbf16>, vector<8x128xf32> -> vector<8x128xf32>
    %c0_3 = arith.constant 0 : index
    %c0_4 = arith.constant 0 : index
    %3 = vector.load %arg3[%c0_3, %c0_4] : memref<1x128xf32, #tpu.memory_space<vmem>>, vector<1x128xf32>
    %4 = vector.broadcast %3 : vector<1x128xf32> to vector<8x128xf32>
    %5 = arith.addf %2, %4 : vector<8x128xf32>
    %cst_5 = arith.constant dense<0xFF800000> : vector<8xf32>
    %6 = vector.multi_reduction <maximumf>, %5, %cst_5 [1] : vector<8x128xf32> to vector<8xf32>
    %7 = vector.shape_cast %6 : vector<8xf32> to vector<8x1xf32>
    %8 = vector.broadcast %7 : vector<8x1xf32> to vector<8x128xf32>
    %9 = arith.subf %5, %8 : vector<8x128xf32>
    %10 = math.exp %9 : vector<8x128xf32>
    %cst_6 = arith.constant dense<0.000000e+00> : vector<8xf32>
    %11 = vector.multi_reduction <add>, %10, %cst_6 [1] : vector<8x128xf32> to vector<8xf32>
    %12 = vector.shape_cast %11 : vector<8xf32> to vector<8x1xf32>
    %13 = vector.broadcast %12 : vector<8x1xf32> to vector<8x128xf32>
    %14 = arith.divf %10, %13 : vector<8x128xf32>
    %c0_7 = arith.constant 0 : index
    %c0_8 = arith.constant 0 : index
    %15 = vector.load %arg4[%c0_7, %c0_8] : memref<8x128xf32, #tpu.memory_space<vmem>>, vector<8x128xf32>
    tpu.vector_store %arg4[%c0_7, %c0_8], %14 {strides = array<i32>} : memref<8x128xf32, #tpu.memory_space<vmem>>, vector<8x128xf32>,
    return
  }
  func.func @transform_0(%arg0: i32) -> (i32, i32) {
    %c0_i32 = arith.constant 0 : i32
    %c0_i32_0 = arith.constant 0 : i32
    return %arg0, %c0_i32 : i32, i32
  }
  func.func @transform_1(%arg0: i32) -> (i32, i32) {
    %c0_i32 = arith.constant 0 : i32
    %c0_i32_0 = arith.constant 0 : i32
    %c0_i32_1 = arith.constant 0 : i32
    return %c0_i32, %c0_i32_0 : i32, i32
  }
  func.func @transform_2(%arg0: i32) -> (i32, i32) {
    %c0_i32 = arith.constant 0 : i32
    %c0_i32_0 = arith.constant 0 : i32
    %c0_i32_1 = arith.constant 0 : i32
    return %c0_i32, %c0_i32_0 : i32, i32
  }
  func.func @transform_3(%arg0: i32) -> (i32, i32) {
    %c0_i32 = arith.constant 0 : i32
    %c0_i32_0 = arith.constant 0 : i32
    return %arg0, %c0_i32 : i32, i32
  }
}

</mosaic_0001>

<llo_original>
// kernel: tpu_custom_call.1
$region0: #{tpu_custom_call.1}
  #allocation0 [shape = 'u32[]', space=smem, size = 0x4, offset = 0x4, fixed_abs, tag = 'smem constant byte address 0x4 - core index']
  #allocation1 [shape = 'u32[144,128]{1,0:T(1,128)}', space=vmem, size = 0x12000, scoped, tag = 'internal scratch']
  %s0 = inlined_call_operand.hbm [shape: bf16[8,128], index: 0, kind: input, shape index: {}]
  %s1 = inlined_call_operand.hbm [shape: bf16[128,128], index: 1, kind: input, shape index: {}]
  %s2 = inlined_call_operand.vmem [shape: f32[1,128], index: 2, kind: input, shape index: {}]
  %s3 = inlined_call_operand.hbm [shape: f32[8,128], index: 3, kind: output, shape index: {}]
  %s4 = sld [smem:[#allocation0]]
  $region30: #{tpu_custom_call.1} parent=0
    _
  %s6 = ssub.s32 1, %s4
  %s7 = scalar_select 0, %s6, %s4
  $region1: #{tpu_custom_call.1} parent=0
    #allocation2 [shape = 'u8[2048]{0}', space=vmem, size = 0x800, scoped, tag = 'input window, operand 0, single buffered']
    #allocation3 [shape = 's32[1]{0}', space=sflag, size = 0x4, scoped, tag = 'scoped memory for tpu_custom_call.1']
    #allocation4 [shape = 's32[1]{0}', space=sflag, size = 0x4, scoped, tag = 'scoped memory for tpu_custom_call.1']
    #allocation5 [shape = 'u8[32768]{0}', space=vmem, size = 0x8000, scoped, tag = 'input window, operand 1, single buffered']
    #allocation6 [shape = 's32[1]{0}', space=sflag, size = 0x4, scoped, tag = 'scoped memory for tpu_custom_call.1']
    #allocation7 [shape = 'u8[4096]{0}', space=vmem, size = 0x1000, scoped, tag = 'output window, operand 0, single buffered']
    %8 = vsyncpa [#allocation3], 0
    %9 = vsyncpa [#allocation6], 0
    %10 = vsyncpa [#allocation4], 0
    // Predicated region
    $region2: #{tpu_custom_call.1} parent=1 // pred_check
      _
    $region3: #{tpu_custom_call.1} parent=1 // pred_check_branch
      %12 = sbr.rel (0) target = $region5
    $region4: #{tpu_custom_call.1} parent=1 // pred_region
      %s14 = ssub.s32 64, 64
      %15 = vsyncadd [#allocation3], %s14
      %s17 = sshll.u32 [#allocation2], 4
      %s18 = int_to_ptr.vmem [resolvable:$true] %s17
      %20 = dma.hbm_to_vmem [thread:$0]  %s0, 64, %s18, [#allocation3]
    $region5: #{tpu_custom_call.1} parent=1 // pred_fallthru
      _
    // Predicated region
    $region6: #{tpu_custom_call.1} parent=1 // pred_check
      _
    $region7: #{tpu_custom_call.1} parent=1 // pred_check_branch
      %22 = sbr.rel (0) target = $region9
    $region8: #{tpu_custom_call.1} parent=1 // pred_region
      %s24 = ssub.s32 1024, 1024
      %25 = vsyncadd [#allocation6], %s24
      %s26 = sshll.u32 [#allocation5], 4
      %s27 = int_to_ptr.vmem [resolvable:$true] %s26
      %32 = dma.hbm_to_vmem [thread:$0]  %s1, 1024, %s27, [#allocation6], 64, 64, 4
    $region9: #{tpu_custom_call.1} parent=1 // pred_fallthru
      _
    // Predicated region
    $region10: #{tpu_custom_call.1} parent=1 // pred_check
      _
    $region11: #{tpu_custom_call.1} parent=1 // pred_check_branch
      %34 = sbr.rel (0) target = $region13
    $region12: #{tpu_custom_call.1} parent=1 // pred_region
      _
    $region13: #{tpu_custom_call.1} parent=1 // pred_fallthru
      _
    // Predicated region
    $region14: #{tpu_custom_call.1} parent=1 // pred_check
      _
    $region15: #{tpu_custom_call.1} parent=1 // pred_check_branch
      %36 = sbr.rel (0) target = $region17
    $region16: #{tpu_custom_call.1} parent=1 // pred_region
      %37 = dma.done [#allocation3], 64
    $region17: #{tpu_custom_call.1} parent=1 // pred_fallthru
      _
    // Predicated region
    $region18: #{tpu_custom_call.1} parent=1 // pred_check
      _
    $region19: #{tpu_custom_call.1} parent=1 // pred_check_branch
      %39 = sbr.rel (0) target = $region21
    $region20: #{tpu_custom_call.1} parent=1 // pred_region
      %40 = dma.done [#allocation6], 1024
    $region21: #{tpu_custom_call.1} parent=1 // pred_fallthru
      _
    %v42 = vld [vmem:[#allocation2] sm:$0xf]
    %v43 = vld [vmem:[#allocation5] sm:$0xf]
    %v44 = vld [vmem:[#allocation5 + $0x4] sm:$0xf]
    %v45 = vld [vmem:[#allocation5 + $0x8] sm:$0xf]
    %v46 = vld [vmem:[#allocation5 + $0xc] sm:$0xf]
    %v47 = vld [vmem:[#allocation5 + $0x10] sm:$0xf]
    %v48 = vld [vmem:[#allocation5 + $0x14] sm:$0xf]
    %v49 = vld [vmem:[#allocation5 + $0x18] sm:$0xf]
    %v50 = vld [vmem:[#allocation5 + $0x1c] sm:$0xf]
    %v51 = vld [vmem:[#allocation5 + $0x20] sm:$0xf]
    %v52 = vld [vmem:[#allocation5 + $0x24] sm:$0xf]
    %v53 = vld [vmem:[#allocation5 + $0x28] sm:$0xf]
    %v54 = vld [vmem:[#allocation5 + $0x2c] sm:$0xf]
    %v55 = vld [vmem:[#allocation5 + $0x30] sm:$0xf]
    %v56 = vld [vmem:[#allocation5 + $0x34] sm:$0xf]
    %v57 = vld [vmem:[#allocation5 + $0x38] sm:$0xf]
    %v58 = vld [vmem:[#allocation5 + $0x3c] sm:$0xf]
    %v59 = vld [vmem:[%s2] sm:$0x1]
    %v61 = vlaneseq
    %v62 = vshrl.u32 %v61, 7
    %v63 = vsub.s32 0, %v62
    %v64 = vrot.slane %v59, %v63
    %v82 = vunpack.c.l.b16 %v43
    %v83 = vunpack.c.l.b16 %v44
    %v84 = vunpack.c.l.b16 %v45
    %v85 = vunpack.c.l.b16 %v46
    %v86 = vunpack.c.l.b16 %v47
    %v87 = vunpack.c.l.b16 %v48
    %v88 = vunpack.c.l.b16 %v49
    %v89 = vunpack.c.l.b16 %v50
    %v90 = vunpack.c.l.b16 %v51
    %v91 = vunpack.c.l.b16 %v52
    %v92 = vunpack.c.l.b16 %v53
    %v93 = vunpack.c.l.b16 %v54
    %v94 = vunpack.c.l.b16 %v55
    %v95 = vunpack.c.l.b16 %v56
    %v96 = vunpack.c.l.b16 %v57
    %v97 = vunpack.c.l.b16 %v58
    %v98 = vpack.c.b16 %v83, %v82
    %v99 = vpack.c.b16 %v85, %v84
    %v100 = vpack.c.b16 %v87, %v86
    %v101 = vpack.c.b16 %v89, %v88
    %v102 = vpack.c.b16 %v91, %v90
    %v103 = vpack.c.b16 %v93, %v92
    %v104 = vpack.c.b16 %v95, %v94
    %v105 = vpack.c.b16 %v97, %v96
    %114 = vmatprep.subr.bf16.mxu0 0
    %115 = vmatpush1.bf16.msra.mxu0 %v98
    %116 = vmatprep.subr.bf16.mxu0 0
    %117 = vmatpush1.bf16.msra.mxu0 %v99
    %118 = vmatprep.subr.bf16.mxu0 0
    %119 = vmatpush1.bf16.msra.mxu0 %v100
    %120 = vmatprep.subr.bf16.mxu0 0
    %121 = vmatpush1.bf16.msra.mxu0 %v101
    %122 = vmatprep.subr.bf16.mxu0 0
    %123 = vmatpush1.bf16.msra.mxu0 %v102
    %124 = vmatprep.subr.bf16.mxu0 0
    %125 = vmatpush1.bf16.msra.mxu0 %v103
    %126 = vmatprep.subr.bf16.mxu0 0
    %127 = vmatpush1.bf16.msra.mxu0 %v104
    %128 = vmatprep.subr.bf16.mxu0 0
    %129 = vmatpush1.bf16.msra.mxu0 %v105
    %130 = vmatprep.subr.bf16.mxu0 0
    %131 = vmatpush1.bf16.msra.mxu0 0
    %132 = vmatprep.subr.bf16.mxu0 0
    %133 = vmatpush1.bf16.msra.mxu0 0
    %134 = vmatprep.subr.bf16.mxu0 0
    %135 = vmatpush1.bf16.msra.mxu0 0
    %136 = vmatprep.subr.bf16.mxu0 0
    %137 = vmatpush1.bf16.msra.mxu0 0
    %138 = vmatprep.subr.bf16.mxu0 0
    %139 = vmatpush1.bf16.msra.mxu0 0
    %140 = vmatprep.subr.bf16.mxu0 0
    %141 = vmatpush1.bf16.msra.mxu0 0
    %142 = vmatprep.subr.bf16.mxu0 0
    %143 = vmatpush1.bf16.msra.mxu0 0
    %144 = vmatprep.subr.bf16.mxu0 0
    %145 = vmatpush1.bf16.msra.mxu0 0
    %146 = vmatprep.mubr.bf16.mxu0 0
    %147 = vmatmul.mubr.bf16.gmra.mrb[0].mxu0 %v42
    %v148 = vpop.f32.mrb[0].mxu0
    %v149 = vadd.f32 %v64, %v148
    %v150 = vpop.f32.mrb[0].mxu0
    %v151 = vpop.f32.mrb[0].mxu0
    %v152 = vpop.f32.mrb[0].mxu0
    %153 = vdwg.mxu0
    %154 = vmax.xlane.f32.xlu0 %v149
    %v155 = vpop.xlane.xlu0 %154
    %v156 = vsub.f32 %v149, %v155
    %v157 = vmul.f32 %v156, 1.442695
    %v158 = vpow.pop %v157
    %159 = vadd.xlane.f32.xlu0 %v158
    %v160 = vpop.xlane.xlu0 %159
    %v161 = vrcp.pop %v160
    %v162 = vmul.f32 %v158, %v161
    %163 = vst [vmem:[#allocation7] sm:$0xff] %v162
    // Predicated region
    $region22: #{tpu_custom_call.1} parent=1 // pred_check
      _
    $region23: #{tpu_custom_call.1} parent=1 // pred_check_branch
      %165 = sbr.rel (0) target = $region25
    $region24: #{tpu_custom_call.1} parent=1 // pred_region
      %s167 = ssub.s32 128, 128
      %168 = vsyncadd [#allocation4], %s167
      %s170 = sshll.u32 [#allocation7], 4
      %s171 = int_to_ptr.vmem [resolvable:$true] %s170
      %173 = dma.vmem_to_hbm [thread:$0]  %s171, 128, %s3, [#allocation4]
    $region25: #{tpu_custom_call.1} parent=1 // pred_fallthru
      _
    // Predicated region
    $region26: #{tpu_custom_call.1} parent=1 // pred_check
      _
    $region27: #{tpu_custom_call.1} parent=1 // pred_check_branch
      %175 = sbr.rel (0) target = $region29
    $region28: #{tpu_custom_call.1} parent=1 // pred_region
      %176 = dma.done [#allocation4], 128
    $region29: #{tpu_custom_call.1} parent=1 // pred_fallthru
      _
    %177 = vsyncpa [#allocation3], 1
    %178 = vsyncpa [#allocation6], 1
    %179 = vsyncpa [#allocation4], 1

</llo_original>
